<compile_context>
chip_gen: v5e
topology: v5e:2x2
jax: 0.10.0
libtpu: 0.0.40
codegen_flags: <defaults>
</compile_context>

<pallas_src>
import jax
import jax.numpy as jnp
from jax import lax
from jax.experimental import pallas as pl
from jax.experimental.pallas import tpu as pltpu

SUBLANE = 8


def _round_up(n, m):
    return (n + m - 1) // m * m


def fused_linear_kernel(x_ref, wt_ref, b_ref, o_ref):
    # x_ref:  [B, K]        (K = 1000, unpadded; block == full array -> legal)
    # wt_ref: [N_pad, K]    (transposed folded weight, N_pad = 16)
    # b_ref:  [1, N_pad]
    # o_ref:  [B, N_pad]
    y = lax.dot_general(
        x_ref[...], wt_ref[...],
        dimension_numbers=(((1,), (1,)), ((), ())),   # contract K with K (x @ Wt^T)
        preferred_element_type=jnp.float32,
    ) + b_ref[...]
    o_ref[...] = y.astype(o_ref.dtype)


def fold_params(w1, b1, w2, b2):
    """Fold the two Linear layers (valid: no nonlinearity between fc1 and fc2).

    fc2(fc1(x)) = (x @ w1 + b1) @ w2 + b2 = x @ (w1 @ w2) + (b1 @ w2 + b2)

    Done once in plain JAX (weights are static across calls).  The folded
    weight is stored transposed [labels_pad, in_dim] so the long K axis is
    lane-dense; labels is sublane-padded 10 -> 16 with exact zeros.
    """
    in_dim = w1.shape[0]
    labels = w2.shape[1]
    W = (w1 @ w2).astype(jnp.float32)          # [in_dim, labels]
    b = (b1 @ w2 + b2).astype(jnp.float32)     # [1, labels]

    n_pad = _round_up(labels, 2 * SUBLANE)     # 10 -> 16
    Wt_p = jnp.zeros((n_pad, in_dim), jnp.float32).at[:labels, :].set(W.T)
    b_p = jnp.zeros((1, n_pad), jnp.float32).at[:, :labels].set(b)
    return Wt_p, b_p, labels


def torch_model_forward(img, Wt_p, b_p, labels):
    """img: [B, C, H, W] float32. Returns [B, labels] float32."""
    B = img.shape[0]
    x = img.reshape(B, -1)                     # nn.Flatten (row-major, like PyTorch)
    n_pad, k = Wt_p.shape

    flops = 2 * B * k * n_pad + B * n_pad
    bytes_accessed = 4 * (x.size + Wt_p.size + b_p.size + B * n_pad)

    out = pl.pallas_call(
        fused_linear_kernel,
        out_shape=jax.ShapeDtypeStruct((B, n_pad), jnp.float32),
        # No grid: single full-array blocks resident in VMEM (no double-buffer waste).
        in_specs=[
            pl.BlockSpec(memory_space=pltpu.MemorySpace.VMEM),
            pl.BlockSpec(memory_space=pltpu.MemorySpace.VMEM),
            pl.BlockSpec(memory_space=pltpu.MemorySpace.VMEM),
        ],
        out_specs=pl.BlockSpec(memory_space=pltpu.MemorySpace.VMEM),
        cost_estimate=pl.CostEstimate(
            flops=flops, transcendentals=0, bytes_accessed=bytes_accessed),
    )(x, Wt_p, b_p)

    return out[:, :labels]                     # drop the 10->16 sublane padding


if __name__ == "__main__":
    key = jax.random.PRNGKey(0)
    k_img, k_w1, k_b1, k_w2, k_b2 = jax.random.split(key, 5)

    B, C, H, W = 2, 10, 10, 10                 # flattens to 1000 features
    IN, HID, LABELS = 1000, 256, 10

    img = jax.random.normal(k_img, (B, C, H, W), dtype=jnp.float32)

    # PyTorch Linear stores weight as [out, in]; we keep the transpose [in, out].
    w1 = jax.random.uniform(k_w1, (IN, HID), jnp.float32, -1.0, 1.0) / jnp.sqrt(IN)
    b1 = jax.random.uniform(k_b1, (1, HID), jnp.float32, -1.0, 1.0) / jnp.sqrt(IN)
    w2 = jax.random.uniform(k_w2, (HID, LABELS), jnp.float32, -1.0, 1.0) / jnp.sqrt(HID)
    b2 = jax.random.uniform(k_b2, (1, LABELS), jnp.float32, -1.0, 1.0) / jnp.sqrt(HID)

    # One-time parameter preparation (fold + transpose + sublane-pad), then forward.
    Wt_p, b_p, labels = fold_params(w1, b1, w2, b2)
    out = torch_model_forward(img, Wt_p, b_p, labels)
    out = jax.block_until_ready(out)

    # Reference check against the unfused two-Linear module in plain JAX.
    ref = img.reshape(B, -1) @ w1 + b1
    ref = ref @ w2 + b2
    assert out.shape == (B, LABELS)
    assert jnp.allclose(out, ref, atol=1e-4, rtol=1e-4)

    print("KERNEL_OK")
</pallas_src>

<mosaic_0001>
module attributes {stable_mosaic.version = 11 : i64} {
  func.func @fused_linear_kernel(%arg0: memref<2x1000xf32, #tpu.memory_space<vmem>>, %arg1: memref<16x1000xf32, #tpu.memory_space<vmem>>, %arg2: memref<1x16xf32, #tpu.memory_space<vmem>>, %arg3: memref<2x16xf32, #tpu.memory_space<vmem>>) attributes {dimension_semantics = [], scalar_prefetch = 0 : i64, scratch_operands = 0 : i64, tpu.core_type = #tpu.core_type<tc>} {
    %c0 = arith.constant 0 : index
    %c0_0 = arith.constant 0 : index
    %0 = vector.load %arg0[%c0, %c0_0] : memref<2x1000xf32, #tpu.memory_space<vmem>>, vector<2x1000xf32>
    %c0_1 = arith.constant 0 : index
    %c0_2 = arith.constant 0 : index
    %1 = vector.load %arg1[%c0_1, %c0_2] : memref<16x1000xf32, #tpu.memory_space<vmem>>, vector<16x1000xf32>
    %cst = arith.constant dense<0.000000e+00> : vector<2x16xf32>
    %2 = tpu.matmul %0, %1, %cst {dimension_numbers = #tpu.dot_dimension_numbers<[1], [1], [0], [0], [0, 0, 1, 0], [], []>} : vector<2x1000xf32>, vector<16x1000xf32>, vector<2x16xf32> -> vector<2x16xf32>
    %c0_3 = arith.constant 0 : index
    %c0_4 = arith.constant 0 : index
    %3 = vector.load %arg2[%c0_3, %c0_4] : memref<1x16xf32, #tpu.memory_space<vmem>>, vector<1x16xf32>
    %4 = vector.broadcast %3 : vector<1x16xf32> to vector<2x16xf32>
    %5 = arith.addf %2, %4 : vector<2x16xf32>
    %c0_5 = arith.constant 0 : index
    %c0_6 = arith.constant 0 : index
    %6 = vector.load %arg3[%c0_5, %c0_6] : memref<2x16xf32, #tpu.memory_space<vmem>>, vector<2x16xf32>
    tpu.vector_store %arg3[%c0_5, %c0_6], %5 {strides = array<i32>} : memref<2x16xf32, #tpu.memory_space<vmem>>, vector<2x16xf32>,
    return
  }
}

</mosaic_0001>

<llo_original>
// kernel: tpu_custom_call.1
$region0: #{tpu_custom_call.1}
  #allocation0 [shape = 'u32[]', space=smem, size = 0x4, offset = 0x4, fixed_abs, tag = 'smem constant byte address 0x4 - core index']
  #allocation1 [shape = 'u32[72,128]{1,0:T(1,128)}', space=vmem, size = 0x9000, scoped, tag = 'internal scratch']
  %s0 = inlined_call_operand.hbm [shape: f32[2,1000], index: 0, kind: input, shape index: {}]
  %s1 = inlined_call_operand.hbm [shape: f32[16,1000], index: 1, kind: input, shape index: {}]
  %s2 = inlined_call_operand.vmem [shape: f32[1,16], index: 2, kind: input, shape index: {}]
  %s3 = inlined_call_operand.hbm [shape: f32[2,16], index: 3, kind: output, shape index: {}]
  %s4 = sld [smem:[#allocation0]]
  $region30: #{tpu_custom_call.1} parent=0
    _
  %s6 = ssub.s32 1, %s4
  %s7 = scalar_select 0, %s6, %s4
  $region1: #{tpu_custom_call.1} parent=0
    #allocation2 [shape = 'u8[8192]{0}', space=vmem, size = 0x2000, scoped, tag = 'input window, operand 0, single buffered']
    #allocation3 [shape = 's32[1]{0}', space=sflag, size = 0x4, scoped, tag = 'scoped memory for tpu_custom_call.1']
    #allocation4 [shape = 's32[1]{0}', space=sflag, size = 0x4, scoped, tag = 'scoped memory for tpu_custom_call.1']
    #allocation5 [shape = 'u8[65536]{0}', space=vmem, size = 0x10000, scoped, tag = 'input window, operand 1, single buffered']
    #allocation6 [shape = 's32[1]{0}', space=sflag, size = 0x4, scoped, tag = 'scoped memory for tpu_custom_call.1']
    #allocation7 [shape = 'u8[1024]{0}', space=vmem, size = 0x400, scoped, tag = 'output window, operand 0, single buffered']
    %8 = vsyncpa [#allocation3], 0
    %9 = vsyncpa [#allocation6], 0
    %10 = vsyncpa [#allocation4], 0
    // Predicated region
    $region2: #{tpu_custom_call.1} parent=1 // pred_check
      _
    $region3: #{tpu_custom_call.1} parent=1 // pred_check_branch
      %12 = sbr.rel (0) target = $region5
    $region4: #{tpu_custom_call.1} parent=1 // pred_region
      %14 = vsyncadd [#allocation3], 0
      %s16 = sshll.u32 %s0, 4
      %s17 = int_to_ptr.hbm [resolvable:$true] %s16
      %s18 = sshll.u32 [#allocation2], 4
      %s19 = int_to_ptr.vmem [resolvable:$true] %s18
      %21 = dma.hbm_to_vmem [thread:$0]  %s17, 256, %s19, [#allocation3]
    $region5: #{tpu_custom_call.1} parent=1 // pred_fallthru
      _
    // Predicated region
    $region6: #{tpu_custom_call.1} parent=1 // pred_check
      _
    $region7: #{tpu_custom_call.1} parent=1 // pred_check_branch
      %23 = sbr.rel (0) target = $region9
    $region8: #{tpu_custom_call.1} parent=1 // pred_region
      %25 = vsyncadd [#allocation6], 0
      %s26 = sshll.u32 %s1, 4
      %s27 = int_to_ptr.hbm [resolvable:$true] %s26
      %s28 = sshll.u32 [#allocation5], 4
      %s29 = int_to_ptr.vmem [resolvable:$true] %s28
      %34 = dma.hbm_to_vmem [thread:$0]  %s27, 2048, %s29, [#allocation6], 1024, 1024, 64
    $region9: #{tpu_custom_call.1} parent=1 // pred_fallthru
      _
    // Predicated region
    $region10: #{tpu_custom_call.1} parent=1 // pred_check
      _
    $region11: #{tpu_custom_call.1} parent=1 // pred_check_branch
      %36 = sbr.rel (0) target = $region13
    $region12: #{tpu_custom_call.1} parent=1 // pred_region
      _
    $region13: #{tpu_custom_call.1} parent=1 // pred_fallthru
      _
    // Predicated region
    $region14: #{tpu_custom_call.1} parent=1 // pred_check
      _
    $region15: #{tpu_custom_call.1} parent=1 // pred_check_branch
      %38 = sbr.rel (0) target = $region17
    $region16: #{tpu_custom_call.1} parent=1 // pred_region
      %40 = dma.done [#allocation3], 256
    $region17: #{tpu_custom_call.1} parent=1 // pred_fallthru
      _
    // Predicated region
    $region18: #{tpu_custom_call.1} parent=1 // pred_check
      _
    $region19: #{tpu_custom_call.1} parent=1 // pred_check_branch
      %42 = sbr.rel (0) target = $region21
    $region20: #{tpu_custom_call.1} parent=1 // pred_region
      %44 = dma.done [#allocation6], 2048
    $region21: #{tpu_custom_call.1} parent=1 // pred_fallthru
      _
    %v45 = vld [vmem:[#allocation2] sm:$0xff]
    %v46 = vld [vmem:[#allocation2 + $0x8] sm:$0xff]
    %v47 = vld [vmem:[#allocation5] sm:$0xff]
    %v48 = vld [vmem:[#allocation5 + $0x8] sm:$0xff]
    %v49 = vld [vmem:[#allocation5 + $0x10] sm:$0xff]
    %v50 = vld [vmem:[#allocation5 + $0x18] sm:$0xff]
    %v51 = vld [vmem:[#allocation5 + $0x20] sm:$0xff]
    %v52 = vld [vmem:[#allocation5 + $0x28] sm:$0xff]
    %v53 = vld [vmem:[#allocation5 + $0x30] sm:$0xff]
    %v54 = vld [vmem:[#allocation5 + $0x38] sm:$0xff]
    %v55 = vld [vmem:[#allocation5 + $0x40] sm:$0xff]
    %v56 = vld [vmem:[#allocation5 + $0x48] sm:$0xff]
    %v57 = vld [vmem:[#allocation5 + $0x50] sm:$0xff]
    %v58 = vld [vmem:[#allocation5 + $0x58] sm:$0xff]
    %v59 = vld [vmem:[#allocation5 + $0x60] sm:$0xff]
    %v60 = vld [vmem:[#allocation5 + $0x68] sm:$0xff]
    %v61 = vld [vmem:[#allocation5 + $0x70] sm:$0xff]
    %v62 = vld [vmem:[#allocation5 + $0x78] sm:$0xff]
    %v63 = vld [vmem:[%s2] sm:$0x1]
    %v65 = vperm.slane %v63, 0
    %69 = vst [vmem:[#allocation1] ss:$4 sm:$0xff] %v45
    %s70 = scalar_lea.vmem [#allocation1], 32
    %71 = vst [vmem:[%s70] ss:$4 sm:$0xff] %v46
    %v72 = vld.sshfl [vmem:[#allocation1] sm:$0xff pattern:$0x73625140]
    %v73 = vld.sshfl [vmem:[#allocation1 + $0x8] sm:$0xff pattern:$0x73625140]
    %v74 = vld.sshfl [vmem:[#allocation1 + $0x10] sm:$0xff pattern:$0x73625140]
    %v75 = vld.sshfl [vmem:[#allocation1 + $0x18] sm:$0xff pattern:$0x73625140]
    %v76 = vld.sshfl [vmem:[#allocation1 + $0x20] sm:$0xff pattern:$0x73625140]
    %v77 = vld.sshfl [vmem:[#allocation1 + $0x28] sm:$0xff pattern:$0x73625140]
    %v78 = vld.sshfl [vmem:[#allocation1 + $0x30] sm:$0xff pattern:$0x73625140]
    %v79 = vld.sshfl [vmem:[#allocation1 + $0x38] sm:$0xff pattern:$0x73625140]
    %vm87 = vcmask 850944
    %v88 = vsel %vm87, %v79, 0
    %v91 = vsel %vm87, %v54, 0
    %v94 = vsel %vm87, %v62, 0
    %96 = vmatpush.xpose.msra.mxu0 0.0
    %97 = vmatpush.xpose.msra.mxu0 0.0
    %98 = vmatpush.xpose.msra.mxu0 0.0
    %99 = vmatpush.xpose.msra.mxu0 0.0
    %100 = vmatpush.xpose.msra.mxu0 0.0
    %101 = vmatpush.xpose.msra.mxu0 0.0
    %102 = vmatpush.xpose.msra.mxu0 0.0
    %103 = vmatpush.xpose.msra.mxu0 0.0
    %104 = vmatpush.xpose.msra.mxu0 0.0
    %105 = vmatpush.xpose.msra.mxu0 0.0
    %106 = vmatpush.xpose.msra.mxu0 0.0
    %107 = vmatpush.xpose.msra.mxu0 0.0
    %108 = vmatpush.xpose.msra.mxu0 0.0
    %109 = vmatpush.xpose.msra.mxu0 0.0
    %110 = vmatpush.xpose.msra.mxu0 %v55
    %111 = vmatpush.xpose.msra.mxu0 %v47
    %112 = vmatmul.f32.gmra.mxu0 %v72
    %v113 = vpop.f32.mrf.mxu0
    %v114 = vadd.f32 %v65, %v113
    %115 = vdwg.mxu0
    %116 = vmatpush.xpose.msra.mxu0 0.0
    %117 = vmatpush.xpose.msra.mxu0 0.0
    %118 = vmatpush.xpose.msra.mxu0 0.0
    %119 = vmatpush.xpose.msra.mxu0 0.0
    %120 = vmatpush.xpose.msra.mxu0 0.0
    %121 = vmatpush.xpose.msra.mxu0 0.0
    %122 = vmatpush.xpose.msra.mxu0 0.0
    %123 = vmatpush.xpose.msra.mxu0 0.0
    %124 = vmatpush.xpose.msra.mxu0 0.0
    %125 = vmatpush.xpose.msra.mxu0 0.0
    %126 = vmatpush.xpose.msra.mxu0 0.0
    %127 = vmatpush.xpose.msra.mxu0 0.0
    %128 = vmatpush.xpose.msra.mxu0 0.0
    %129 = vmatpush.xpose.msra.mxu0 0.0
    %130 = vmatpush.xpose.msra.mxu0 %v56
    %131 = vmatpush.xpose.msra.mxu0 %v48
    %132 = vmatmul.f32.gmra.mxu0 %v73
    %v133 = vpop.f32.mrf.mxu0
    %v134 = vadd.f32 %v114, %v133
    %135 = vdwg.mxu0
    %136 = vmatpush.xpose.msra.mxu0 0.0
    %137 = vmatpush.xpose.msra.mxu0 0.0
    %138 = vmatpush.xpose.msra.mxu0 0.0
    %139 = vmatpush.xpose.msra.mxu0 0.0
    %140 = vmatpush.xpose.msra.mxu0 0.0
    %141 = vmatpush.xpose.msra.mxu0 0.0
    %142 = vmatpush.xpose.msra.mxu0 0.0
    %143 = vmatpush.xpose.msra.mxu0 0.0
    %144 = vmatpush.xpose.msra.mxu0 0.0
    %145 = vmatpush.xpose.msra.mxu0 0.0
    %146 = vmatpush.xpose.msra.mxu0 0.0
    %147 = vmatpush.xpose.msra.mxu0 0.0
    %148 = vmatpush.xpose.msra.mxu0 0.0
    %149 = vmatpush.xpose.msra.mxu0 0.0
    %150 = vmatpush.xpose.msra.mxu0 %v57
    %151 = vmatpush.xpose.msra.mxu0 %v49
    %152 = vmatmul.f32.gmra.mxu0 %v74
    %v153 = vpop.f32.mrf.mxu0
    %v154 = vadd.f32 %v134, %v153
    %155 = vdwg.mxu0
    %156 = vmatpush.xpose.msra.mxu0 0.0
    %157 = vmatpush.xpose.msra.mxu0 0.0
    %158 = vmatpush.xpose.msra.mxu0 0.0
    %159 = vmatpush.xpose.msra.mxu0 0.0
    %160 = vmatpush.xpose.msra.mxu0 0.0
    %161 = vmatpush.xpose.msra.mxu0 0.0
    %162 = vmatpush.xpose.msra.mxu0 0.0
    %163 = vmatpush.xpose.msra.mxu0 0.0
    %164 = vmatpush.xpose.msra.mxu0 0.0
    %165 = vmatpush.xpose.msra.mxu0 0.0
    %166 = vmatpush.xpose.msra.mxu0 0.0
    %167 = vmatpush.xpose.msra.mxu0 0.0
    %168 = vmatpush.xpose.msra.mxu0 0.0
    %169 = vmatpush.xpose.msra.mxu0 0.0
    %170 = vmatpush.xpose.msra.mxu0 %v58
    %171 = vmatpush.xpose.msra.mxu0 %v50
    %172 = vmatmul.f32.gmra.mxu0 %v75
    %v173 = vpop.f32.mrf.mxu0
    %v174 = vadd.f32 %v154, %v173
    %175 = vdwg.mxu0
    %176 = vmatpush.xpose.msra.mxu0 0.0
    %177 = vmatpush.xpose.msra.mxu0 0.0
    %178 = vmatpush.xpose.msra.mxu0 0.0
    %179 = vmatpush.xpose.msra.mxu0 0.0
    %180 = vmatpush.xpose.msra.mxu0 0.0
    %181 = vmatpush.xpose.msra.mxu0 0.0
    %182 = vmatpush.xpose.msra.mxu0 0.0
    %183 = vmatpush.xpose.msra.mxu0 0.0
    %184 = vmatpush.xpose.msra.mxu0 0.0
    %185 = vmatpush.xpose.msra.mxu0 0.0
    %186 = vmatpush.xpose.msra.mxu0 0.0
    %187 = vmatpush.xpose.msra.mxu0 0.0
    %188 = vmatpush.xpose.msra.mxu0 0.0
    %189 = vmatpush.xpose.msra.mxu0 0.0
    %190 = vmatpush.xpose.msra.mxu0 %v59
    %191 = vmatpush.xpose.msra.mxu0 %v51
    %192 = vmatmul.f32.gmra.mxu0 %v76
    %v193 = vpop.f32.mrf.mxu0
    %v194 = vadd.f32 %v174, %v193
    %195 = vdwg.mxu0
    %196 = vmatpush.xpose.msra.mxu0 0.0
    %197 = vmatpush.xpose.msra.mxu0 0.0
    %198 = vmatpush.xpose.msra.mxu0 0.0
    %199 = vmatpush.xpose.msra.mxu0 0.0
    %200 = vmatpush.xpose.msra.mxu0 0.0
    %201 = vmatpush.xpose.msra.mxu0 0.0
    %202 = vmatpush.xpose.msra.mxu0 0.0
    %203 = vmatpush.xpose.msra.mxu0 0.0
    %204 = vmatpush.xpose.msra.mxu0 0.0
    %205 = vmatpush.xpose.msra.mxu0 0.0
    %206 = vmatpush.xpose.msra.mxu0 0.0
    %207 = vmatpush.xpose.msra.mxu0 0.0
    %208 = vmatpush.xpose.msra.mxu0 0.0
    %209 = vmatpush.xpose.msra.mxu0 0.0
    %210 = vmatpush.xpose.msra.mxu0 %v60
    %211 = vmatpush.xpose.msra.mxu0 %v52
    %212 = vmatmul.f32.gmra.mxu0 %v77
    %v213 = vpop.f32.mrf.mxu0
    %v214 = vadd.f32 %v194, %v213
    %215 = vdwg.mxu0
    %216 = vmatpush.xpose.msra.mxu0 0.0
    %217 = vmatpush.xpose.msra.mxu0 0.0
    %218 = vmatpush.xpose.msra.mxu0 0.0
    %219 = vmatpush.xpose.msra.mxu0 0.0
    %220 = vmatpush.xpose.msra.mxu0 0.0
    %221 = vmatpush.xpose.msra.mxu0 0.0
    %222 = vmatpush.xpose.msra.mxu0 0.0
    %223 = vmatpush.xpose.msra.mxu0 0.0
    %224 = vmatpush.xpose.msra.mxu0 0.0
    %225 = vmatpush.xpose.msra.mxu0 0.0
    %226 = vmatpush.xpose.msra.mxu0 0.0
    %227 = vmatpush.xpose.msra.mxu0 0.0
    %228 = vmatpush.xpose.msra.mxu0 0.0
    %229 = vmatpush.xpose.msra.mxu0 0.0
    %230 = vmatpush.xpose.msra.mxu0 %v61
    %231 = vmatpush.xpose.msra.mxu0 %v53
    %232 = vmatmul.f32.gmra.mxu0 %v78
    %v233 = vpop.f32.mrf.mxu0
    %v234 = vadd.f32 %v214, %v233
    %235 = vdwg.mxu0
    %236 = vmatpush.xpose.msra.mxu0 0.0
    %237 = vmatpush.xpose.msra.mxu0 0.0
    %238 = vmatpush.xpose.msra.mxu0 0.0
    %239 = vmatpush.xpose.msra.mxu0 0.0
    %240 = vmatpush.xpose.msra.mxu0 0.0
    %241 = vmatpush.xpose.msra.mxu0 0.0
    %242 = vmatpush.xpose.msra.mxu0 0.0
    %243 = vmatpush.xpose.msra.mxu0 0.0
    %244 = vmatpush.xpose.msra.mxu0 0.0
    %245 = vmatpush.xpose.msra.mxu0 0.0
    %246 = vmatpush.xpose.msra.mxu0 0.0
    %247 = vmatpush.xpose.msra.mxu0 0.0
    %248 = vmatpush.xpose.msra.mxu0 0.0
    %249 = vmatpush.xpose.msra.mxu0 0.0
    %250 = vmatpush.xpose.msra.mxu0 %v94
    %251 = vmatpush.xpose.msra.mxu0 %v91
    %252 = vmatmul.f32.gmra.mxu0 %v88
    %v253 = vpop.f32.mrf.mxu0
    %v254 = vadd.f32 %v234, %v253
    %255 = vdwg.mxu0
    %vm256 = vcmask 123904
    %257 = vst.msk [vmem:[#allocation7] sm:$0x3] %vm256, %v254
    // Predicated region
    $region22: #{tpu_custom_call.1} parent=1 // pred_check
      _
    $region23: #{tpu_custom_call.1} parent=1 // pred_check_branch
      %259 = sbr.rel (0) target = $region25
    $region24: #{tpu_custom_call.1} parent=1 // pred_region
      %261 = vsyncadd [#allocation4], 0
      %s263 = sshll.u32 [#allocation7], 4
      %s264 = int_to_ptr.vmem [resolvable:$true] %s263
      %s265 = sshll.u32 %s3, 4
      %s266 = int_to_ptr.hbm [resolvable:$true] %s265
      %268 = dma.vmem_to_hbm [thread:$0]  %s264, 32, %s266, [#allocation4]
    $region25: #{tpu_custom_call.1} parent=1 // pred_fallthru
      _
    // Predicated region
    $region26: #{tpu_custom_call.1} parent=1 // pred_check
      _
    $region27: #{tpu_custom_call.1} parent=1 // pred_check_branch
      %270 = sbr.rel (0) target = $region29
    $region28: #{tpu_custom_call.1} parent=1 // pred_region
      %272 = dma.done [#allocation4], 32
    $region29: #{tpu_custom_call.1} parent=1 // pred_fallthru
      _
    %273 = vsyncpa [#allocation3], 1
    %274 = vsyncpa [#allocation6], 1
    %275 = vsyncpa [#allocation4], 1

</llo_original>
